<compile_context>
chip_gen: v7x
topology: tpu7x:2x2x1
jax: 0.10.0
libtpu: 0.0.40
codegen_flags: <defaults>
</compile_context>

<pallas_src>
import jax
import jax.numpy as jnp
from jax import lax
from jax.experimental import pallas as pl
from jax.experimental.pallas import tpu as pltpu

_IN_FEATURES = 30
_TILE_B_TARGET = 8192                 # batch rows per grid step (multiple of 128)
_VMEM_LIMIT_BYTES = 48 * 1024 * 1024  # ~2x the per-tile footprint; < 64 MiB (v7x)

# Host-side zero padding of hidden dims to bf16-friendly (16,128) tile sizes.
_H1, _H2, _H3 = 48, 64, 64            # real sizes 40, 50, 60


def _round_up(n: int, m: int) -> int:
    return ((n + m - 1) // m) * m


def _mlp_kernel(x_ref, w1_ref, b1_ref, w2_ref, b2_ref, w3_ref, b3_ref,
                w4_ref, b4_ref, o_ref):
    """One batch tile.

    x_ref  : (T, 30)   f32   batch-major input tile (cast to bf16 in-kernel)
    w1_ref : (48, 30)  bf16  (out, in), zero-padded rows 40..47
    w2_ref : (64, 48)  bf16  zero-padded in/out
    w3_ref : (64, 64)  bf16  zero-padded in/out
    bN_ref : (out, 1)  f32   zero-padded
    w4_ref : (64, 1)   f32   layer-4 weight as a column (zero-padded 60..63)
    b4_ref : (1, 1)    f32
    o_ref  : (1, T)    f32   lane-dense output row for this tile
    """
    x = x_ref[...].astype(jnp.bfloat16)                                  # (T, 30)

    # Layer 1, feature-major: h1 = W1 . x^T  (contract the last axes of both).
    h = lax.dot_general(w1_ref[...], x, (((1,), (1,)), ((), ())),
                        preferred_element_type=jnp.float32)              # (48, T)
    h = jnp.maximum(h + b1_ref[...], 0.0).astype(jnp.bfloat16)

    h = jnp.dot(w2_ref[...], h, preferred_element_type=jnp.float32)      # (64, T)
    h = jnp.maximum(h + b2_ref[...], 0.0).astype(jnp.bfloat16)

    h = jnp.dot(w3_ref[...], h, preferred_element_type=jnp.float32)      # (64, T)
    h = jnp.maximum(h + b3_ref[...], 0.0)                                # f32

    # Layer 4 (out_features == 1) on the VPU/XLU: weighted row-sum, f32.
    out = jnp.sum(w4_ref[...] * h, axis=0, keepdims=True) + b4_ref[...]  # (1, T)
    o_ref[...] = out.astype(o_ref.dtype)


def init_params(key):
    """PyTorch-layout params: W is (out_features, in_features), b is (out_features,)."""
    dims = [(30, 40), (40, 50), (50, 60), (60, 1)]
    params = {}
    for i, (fan_in, fan_out) in enumerate(dims, start=1):
        key, kw, kb = jax.random.split(key, 3)
        bound = 1.0 / (fan_in ** 0.5)  # PyTorch default uniform bound
        params[f"w{i}"] = jax.random.uniform(
            kw, (fan_out, fan_in), jnp.float32, minval=-bound, maxval=bound)
        params[f"b{i}"] = jax.random.uniform(
            kb, (fan_out,), jnp.float32, minval=-bound, maxval=bound)
    return params


def prepare_params(params):
    """Kernel-layout params.

    Layers 1-3: bf16 weights zero-padded to (48,30), (64,48), (64,64); f32
    biases (out_pad, 1).  Layer 4: f32 column (64,1) + (1,1) bias (VPU path).
    Zero padding is exact: padded activation rows are relu(0+0)=0 and padded
    weight columns multiply those zero rows.
    """
    out_pad = {1: _H1, 2: _H2, 3: _H3}
    in_pad = {1: _IN_FEATURES, 2: _H1, 3: _H2}
    prepped = {}
    for i in (1, 2, 3):
        w = params[f"w{i}"]
        b = params[f"b{i}"]
        w = jnp.pad(w, ((0, out_pad[i] - w.shape[0]), (0, in_pad[i] - w.shape[1])))
        b = jnp.pad(b, (0, out_pad[i] - b.shape[0]))
        prepped[f"w{i}"] = w.astype(jnp.bfloat16)
        prepped[f"b{i}"] = b.astype(jnp.float32).reshape(-1, 1)
    w4 = params["w4"].reshape(-1)                       # (60,)
    w4 = jnp.pad(w4, (0, _H3 - w4.shape[0]))
    prepped["w4"] = w4.astype(jnp.float32).reshape(-1, 1)   # (64, 1)
    prepped["b4"] = params["b4"].astype(jnp.float32).reshape(1, 1)
    return prepped


def _ann_forward_impl(x, prepped, *, tile_b=_TILE_B_TARGET):
    """x: (B, ...) with prod(...) == 30.  Returns (B, 1) float32."""
    B = x.shape[0]
    x2 = x.reshape(B, -1).astype(jnp.float32)
    assert x2.shape[1] == _IN_FEATURES, x2.shape

    # Pad batch only to a multiple of 128 (not to a multiple of the tile).
    b_pad = _round_up(B, 128)
    if b_pad != B:
        x2 = jnp.pad(x2, ((0, b_pad - B), (0, 0)))

    tile = min(tile_b, b_pad)
    num_tiles = pl.cdiv(b_pad, tile)
    # v7x has two TensorCores: give the "parallel" axis >= 2 steps when there
    # is enough work to amortize the per-step overhead.
    if num_tiles == 1 and b_pad >= 2048:
        tile = _round_up(b_pad // 2, 128)
        num_tiles = pl.cdiv(b_pad, tile)

    w1, b1 = prepped["w1"], prepped["b1"]
    w2, b2 = prepped["w2"], prepped["b2"]
    w3, b3 = prepped["w3"], prepped["b3"]
    w4, b4 = prepped["w4"], prepped["b4"]

    def const_spec(a):  # full-array block, resident in VMEM across grid steps
        return pl.BlockSpec(a.shape, lambda i: (0, 0))

    args = (x2, w1, b1, w2, b2, w3, b3, w4, b4)
    flops = 2 * (30 * 40 + 40 * 50 + 50 * 60 + 60 * 1) * b_pad
    bytes_accessed = sum(a.size * a.dtype.itemsize for a in args) + b_pad * 4
    cost = pl.CostEstimate(flops=flops, transcendentals=0,
                           bytes_accessed=bytes_accessed)

    out = pl.pallas_call(
        _mlp_kernel,
        out_shape=jax.ShapeDtypeStruct((1, b_pad), jnp.float32),
        grid=(num_tiles,),
        in_specs=[
            pl.BlockSpec((tile, _IN_FEATURES), lambda i: (i, 0)),  # x tile (batch-major)
            const_spec(w1), const_spec(b1),
            const_spec(w2), const_spec(b2),
            const_spec(w3), const_spec(b3),
            const_spec(w4), const_spec(b4),
        ],
        out_specs=pl.BlockSpec((1, tile), lambda i: (0, i)),
        compiler_params=pltpu.CompilerParams(
            dimension_semantics=("parallel",),
            vmem_limit_bytes=_VMEM_LIMIT_BYTES),
        cost_estimate=cost,
    )(*args)

    return out[0, :B].reshape(B, 1)


ann_forward = jax.jit(_ann_forward_impl, static_argnames=("tile_b",))


def reference_forward(x, params):
    """Pure-JAX f32 reference of the PyTorch forward."""
    h = x.reshape(x.shape[0], -1)
    for i in (1, 2, 3):
        h = jnp.maximum(h @ params[f"w{i}"].T + params[f"b{i}"], 0.0)
    return h @ params["w4"].T + params["b4"]


if __name__ == "__main__":
    key = jax.random.PRNGKey(0)
    kx, kp = jax.random.split(key)

    B = 8
    # Input as (B, 5, 6); nn.Flatten -> (B, 30).
    x = jax.random.normal(kx, (B, 5, 6), dtype=jnp.float32)

    params = init_params(kp)
    prepped = prepare_params(params)

    out = ann_forward(x, prepped)
    out = jax.block_until_ready(out)

    ref = reference_forward(x, params)
    assert out.shape == (B, 1), out.shape
    # Loose tolerance: dot operands are bf16 (MXU fast path); accumulation is f32.
    assert jnp.allclose(out, ref, atol=5e-2, rtol=5e-2), (out, ref)

    print("KERNEL_OK")
</pallas_src>

<mosaic_0001>
module attributes {stable_mosaic.version = 11 : i64} {
  func.func @_mlp_kernel(%arg0: i32, %arg1: memref<128x30xf32, #tpu.memory_space<vmem>>, %arg2: memref<48x30xbf16, #tpu.memory_space<vmem>>, %arg3: memref<48x1xf32, #tpu.memory_space<vmem>>, %arg4: memref<64x48xbf16, #tpu.memory_space<vmem>>, %arg5: memref<64x1xf32, #tpu.memory_space<vmem>>, %arg6: memref<64x64xbf16, #tpu.memory_space<vmem>>, %arg7: memref<64x1xf32, #tpu.memory_space<vmem>>, %arg8: memref<64x1xf32, #tpu.memory_space<vmem>>, %arg9: memref<1x1xf32, #tpu.memory_space<vmem>>, %arg10: memref<1x128xf32, #tpu.memory_space<vmem>>) attributes {dimension_semantics = [#tpu.dimension_semantics<parallel>], iteration_bounds = array<i64: 1>, scalar_prefetch = 0 : i64, scratch_operands = 0 : i64, tpu.core_type = #tpu.core_type<tc>, window_params = [{transform_indices = @transform_0, window_bounds = array<i64: 128, 30>}, {pipeline_mode = #tpu.pipeline_mode<synchronous>, transform_indices = @transform_1, window_bounds = array<i64: 48, 30>}, {pipeline_mode = #tpu.pipeline_mode<synchronous>, transform_indices = @transform_2, window_bounds = array<i64: 48, 1>}, {pipeline_mode = #tpu.pipeline_mode<synchronous>, transform_indices = @transform_3, window_bounds = array<i64: 64, 48>}, {pipeline_mode = #tpu.pipeline_mode<synchronous>, transform_indices = @transform_4, window_bounds = array<i64: 64, 1>}, {pipeline_mode = #tpu.pipeline_mode<synchronous>, transform_indices = @transform_5, window_bounds = array<i64: 64, 64>}, {pipeline_mode = #tpu.pipeline_mode<synchronous>, transform_indices = @transform_6, window_bounds = array<i64: 64, 1>}, {pipeline_mode = #tpu.pipeline_mode<synchronous>, transform_indices = @transform_7, window_bounds = array<i64: 64, 1>}, {pipeline_mode = #tpu.pipeline_mode<synchronous>, transform_indices = @transform_8, window_bounds = array<i64: 1, 1>}, {transform_indices = @transform_9, window_bounds = array<i64: 1, 128>}]} {
    %c0 = arith.constant 0 : index
    %c0_0 = arith.constant 0 : index
    %0 = vector.load %arg1[%c0, %c0_0] : memref<128x30xf32, #tpu.memory_space<vmem>>, vector<128x30xf32>
    %1 = arith.truncf %0 : vector<128x30xf32> to vector<128x30xbf16>
    %c0_1 = arith.constant 0 : index
    %c0_2 = arith.constant 0 : index
    %2 = vector.load %arg2[%c0_1, %c0_2] : memref<48x30xbf16, #tpu.memory_space<vmem>>, vector<48x30xbf16>
    %cst = arith.constant dense<0.000000e+00> : vector<48x128xf32>
    %3 = tpu.matmul %2, %1, %cst {dimension_numbers = #tpu.dot_dimension_numbers<[1], [1], [0], [0], [0, 0, 1, 0], [], []>} : vector<48x30xbf16>, vector<128x30xbf16>, vector<48x128xf32> -> vector<48x128xf32>
    %c0_3 = arith.constant 0 : index
    %c0_4 = arith.constant 0 : index
    %4 = vector.load %arg3[%c0_3, %c0_4] : memref<48x1xf32, #tpu.memory_space<vmem>>, vector<48x1xf32>
    %5 = vector.broadcast %4 : vector<48x1xf32> to vector<48x128xf32>
    %6 = arith.addf %3, %5 : vector<48x128xf32>
    %cst_5 = arith.constant 0.000000e+00 : f32
    %7 = vector.broadcast %cst_5 : f32 to vector<48x128xf32>
    %8 = arith.maximumf %6, %7 : vector<48x128xf32>
    %9 = arith.truncf %8 : vector<48x128xf32> to vector<48x128xbf16>
    %c0_6 = arith.constant 0 : index
    %c0_7 = arith.constant 0 : index
    %10 = vector.load %arg4[%c0_6, %c0_7] : memref<64x48xbf16, #tpu.memory_space<vmem>>, vector<64x48xbf16>
    %cst_8 = arith.constant dense<0.000000e+00> : vector<64x128xf32>
    %11 = tpu.matmul %10, %9, %cst_8 {dimension_numbers = #tpu.dot_dimension_numbers<[1], [0], [0], [1], [0, 0, 1, 1], [], []>} : vector<64x48xbf16>, vector<48x128xbf16>, vector<64x128xf32> -> vector<64x128xf32>
    %c0_9 = arith.constant 0 : index
    %c0_10 = arith.constant 0 : index
    %12 = vector.load %arg5[%c0_9, %c0_10] : memref<64x1xf32, #tpu.memory_space<vmem>>, vector<64x1xf32>
    %13 = vector.broadcast %12 : vector<64x1xf32> to vector<64x128xf32>
    %14 = arith.addf %11, %13 : vector<64x128xf32>
    %cst_11 = arith.constant 0.000000e+00 : f32
    %15 = vector.broadcast %cst_11 : f32 to vector<64x128xf32>
    %16 = arith.maximumf %14, %15 : vector<64x128xf32>
    %17 = arith.truncf %16 : vector<64x128xf32> to vector<64x128xbf16>
    %c0_12 = arith.constant 0 : index
    %c0_13 = arith.constant 0 : index
    %18 = vector.load %arg6[%c0_12, %c0_13] : memref<64x64xbf16, #tpu.memory_space<vmem>>, vector<64x64xbf16>
    %cst_14 = arith.constant dense<0.000000e+00> : vector<64x128xf32>
    %19 = tpu.matmul %18, %17, %cst_14 {dimension_numbers = #tpu.dot_dimension_numbers<[1], [0], [0], [1], [0, 0, 1, 1], [], []>} : vector<64x64xbf16>, vector<64x128xbf16>, vector<64x128xf32> -> vector<64x128xf32>
    %c0_15 = arith.constant 0 : index
    %c0_16 = arith.constant 0 : index
    %20 = vector.load %arg7[%c0_15, %c0_16] : memref<64x1xf32, #tpu.memory_space<vmem>>, vector<64x1xf32>
    %21 = vector.broadcast %20 : vector<64x1xf32> to vector<64x128xf32>
    %22 = arith.addf %19, %21 : vector<64x128xf32>
    %cst_17 = arith.constant 0.000000e+00 : f32
    %23 = vector.broadcast %cst_17 : f32 to vector<64x128xf32>
    %24 = arith.maximumf %22, %23 : vector<64x128xf32>
    %c0_18 = arith.constant 0 : index
    %c0_19 = arith.constant 0 : index
    %25 = vector.load %arg8[%c0_18, %c0_19] : memref<64x1xf32, #tpu.memory_space<vmem>>, vector<64x1xf32>
    %26 = vector.broadcast %25 : vector<64x1xf32> to vector<64x128xf32>
    %27 = arith.mulf %26, %24 : vector<64x128xf32>
    %cst_20 = arith.constant dense<0.000000e+00> : vector<128xf32>
    %28 = vector.multi_reduction <add>, %27, %cst_20 [0] : vector<64x128xf32> to vector<128xf32>
    %29 = vector.shape_cast %28 : vector<128xf32> to vector<1x128xf32>
    %c0_21 = arith.constant 0 : index
    %c0_22 = arith.constant 0 : index
    %30 = vector.load %arg9[%c0_21, %c0_22] : memref<1x1xf32, #tpu.memory_space<vmem>>, vector<1x1xf32>
    %31 = vector.broadcast %30 : vector<1x1xf32> to vector<1x128xf32>
    %32 = arith.addf %29, %31 : vector<1x128xf32>
    %c0_23 = arith.constant 0 : index
    %c0_24 = arith.constant 0 : index
    %33 = vector.load %arg10[%c0_23, %c0_24] : memref<1x128xf32, #tpu.memory_space<vmem>>, vector<1x128xf32>
    tpu.vector_store %arg10[%c0_23, %c0_24], %32 {strides = array<i32>} : memref<1x128xf32, #tpu.memory_space<vmem>>, vector<1x128xf32>,
    return
  }
  func.func @transform_0(%arg0: i32) -> (i32, i32) {
    %c0_i32 = arith.constant 0 : i32
    %c0_i32_0 = arith.constant 0 : i32
    return %arg0, %c0_i32 : i32, i32
  }
  func.func @transform_1(%arg0: i32) -> (i32, i32) {
    %c0_i32 = arith.constant 0 : i32
    %c0_i32_0 = arith.constant 0 : i32
    %c0_i32_1 = arith.constant 0 : i32
    return %c0_i32, %c0_i32_0 : i32, i32
  }
  func.func @transform_2(%arg0: i32) -> (i32, i32) {
    %c0_i32 = arith.constant 0 : i32
    %c0_i32_0 = arith.constant 0 : i32
    %c0_i32_1 = arith.constant 0 : i32
    return %c0_i32, %c0_i32_0 : i32, i32
  }
  func.func @transform_3(%arg0: i32) -> (i32, i32) {
    %c0_i32 = arith.constant 0 : i32
    %c0_i32_0 = arith.constant 0 : i32
    %c0_i32_1 = arith.constant 0 : i32
    return %c0_i32, %c0_i32_0 : i32, i32
  }
  func.func @transform_4(%arg0: i32) -> (i32, i32) {
    %c0_i32 = arith.constant 0 : i32
    %c0_i32_0 = arith.constant 0 : i32
    %c0_i32_1 = arith.constant 0 : i32
    return %c0_i32, %c0_i32_0 : i32, i32
  }
  func.func @transform_5(%arg0: i32) -> (i32, i32) {
    %c0_i32 = arith.constant 0 : i32
    %c0_i32_0 = arith.constant 0 : i32
    %c0_i32_1 = arith.constant 0 : i32
    return %c0_i32, %c0_i32_0 : i32, i32
  }
  func.func @transform_6(%arg0: i32) -> (i32, i32) {
    %c0_i32 = arith.constant 0 : i32
    %c0_i32_0 = arith.constant 0 : i32
    %c0_i32_1 = arith.constant 0 : i32
    return %c0_i32, %c0_i32_0 : i32, i32
  }
  func.func @transform_7(%arg0: i32) -> (i32, i32) {
    %c0_i32 = arith.constant 0 : i32
    %c0_i32_0 = arith.constant 0 : i32
    %c0_i32_1 = arith.constant 0 : i32
    return %c0_i32, %c0_i32_0 : i32, i32
  }
  func.func @transform_8(%arg0: i32) -> (i32, i32) {
    %c0_i32 = arith.constant 0 : i32
    %c0_i32_0 = arith.constant 0 : i32
    %c0_i32_1 = arith.constant 0 : i32
    return %c0_i32, %c0_i32_0 : i32, i32
  }
  func.func @transform_9(%arg0: i32) -> (i32, i32) {
    %c0_i32 = arith.constant 0 : i32
    %c0_i32_0 = arith.constant 0 : i32
    return %c0_i32, %arg0 : i32, i32
  }
}

</mosaic_0001>

<llo_original>
// kernel: _ann_forward_impl.1
$region0: #{_ann_forward_impl.1}
  #allocation0 [shape = 'u32[]', space=smem, size = 0x4, offset = 0x4, fixed_abs, tag = 'smem constant byte address 0x4 - core index']
  #allocation1 [shape = 'u32[144,128]{1,0:T(1,128)}', space=vmem, size = 0x12000, scoped, tag = 'internal scratch']
  #allocation2 [shape = 'f32[1,1]{1,0:T(1,128)S(1)}', space=vmem, size = 0x200, scoped, tag = 'scoped memory for _ann_forward_impl.1']
  %s0 = inlined_call_operand.vmem [shape: f32[128,30], index: 0, kind: input, shape index: {}]
  %s1 = inlined_call_operand.vmem [shape: bf16[48,30], index: 1, kind: input, shape index: {}]
  %s2 = inlined_call_operand.vmem [shape: f32[48,1], index: 2, kind: input, shape index: {}]
  %s3 = inlined_call_operand.vmem [shape: bf16[64,48], index: 3, kind: input, shape index: {}]
  %s4 = inlined_call_operand.vmem [shape: f32[64,1], index: 4, kind: input, shape index: {}]
  %s5 = inlined_call_operand.vmem [shape: bf16[64,64], index: 5, kind: input, shape index: {}]
  %s6 = inlined_call_operand.vmem [shape: f32[64,1], index: 6, kind: input, shape index: {}]
  %s7 = inlined_call_operand.vmem [shape: f32[64,1], index: 7, kind: input, shape index: {}]
  %s8 = inlined_call_operand.<no memory space> [shape: f32[1,1], index: 8, kind: input, shape index: {}]
  %s9 = inlined_call_operand.vmem [shape: f32[1,128], index: 9, kind: output, shape index: {}]
  %s10 = sld [smem:[#allocation0]]
  $region46: #{_ann_forward_impl.1} parent=0
    _
  %s12 = ssub.s32 1, %s10
  %s13 = scalar_select 0, %s12, %s10
  %v14 = vstv %s8
  %15 = vst [vmem:[#allocation2] sm:$0x1] %v14
  // Predicated region
  $region2: #{_ann_forward_impl.1} parent=0 // pred_check
    _
  $region3: #{_ann_forward_impl.1} parent=0 // pred_check_branch
    %17 = sbr.rel (0) target = $region5
  $region4: #{_ann_forward_impl.1} parent=0 // pred_region
    _
  $region5: #{_ann_forward_impl.1} parent=0 // pred_fallthru
    _
  // Predicated region
  $region6: #{_ann_forward_impl.1} parent=0 // pred_check
    _
  $region7: #{_ann_forward_impl.1} parent=0 // pred_check_branch
    %19 = sbr.rel (0) target = $region9
  $region8: #{_ann_forward_impl.1} parent=0 // pred_region
    _
  $region9: #{_ann_forward_impl.1} parent=0 // pred_fallthru
    _
  // Predicated region
  $region10: #{_ann_forward_impl.1} parent=0 // pred_check
    _
  $region11: #{_ann_forward_impl.1} parent=0 // pred_check_branch
    %21 = sbr.rel (0) target = $region13
  $region12: #{_ann_forward_impl.1} parent=0 // pred_region
    _
  $region13: #{_ann_forward_impl.1} parent=0 // pred_fallthru
    _
  // Predicated region
  $region14: #{_ann_forward_impl.1} parent=0 // pred_check
    _
  $region15: #{_ann_forward_impl.1} parent=0 // pred_check_branch
    %23 = sbr.rel (0) target = $region17
  $region16: #{_ann_forward_impl.1} parent=0 // pred_region
    _
  $region17: #{_ann_forward_impl.1} parent=0 // pred_fallthru
    _
  // Predicated region
  $region18: #{_ann_forward_impl.1} parent=0 // pred_check
    _
  $region19: #{_ann_forward_impl.1} parent=0 // pred_check_branch
    %25 = sbr.rel (0) target = $region21
  $region20: #{_ann_forward_impl.1} parent=0 // pred_region
    _
  $region21: #{_ann_forward_impl.1} parent=0 // pred_fallthru
    _
  // Predicated region
  $region22: #{_ann_forward_impl.1} parent=0 // pred_check
    _
  $region23: #{_ann_forward_impl.1} parent=0 // pred_check_branch
    %27 = sbr.rel (0) target = $region25
  $region24: #{_ann_forward_impl.1} parent=0 // pred_region
    _
  $region25: #{_ann_forward_impl.1} parent=0 // pred_fallthru
    _
  // Predicated region
  $region26: #{_ann_forward_impl.1} parent=0 // pred_check
    _
  $region27: #{_ann_forward_impl.1} parent=0 // pred_check_branch
    %29 = sbr.rel (0) target = $region29
  $region28: #{_ann_forward_impl.1} parent=0 // pred_region
    _
  $region29: #{_ann_forward_impl.1} parent=0 // pred_fallthru
    _
  // Predicated region
  $region30: #{_ann_forward_impl.1} parent=0 // pred_check
    _
  $region31: #{_ann_forward_impl.1} parent=0 // pred_check_branch
    %31 = sbr.rel (0) target = $region33
  $region32: #{_ann_forward_impl.1} parent=0 // pred_region
    _
  $region33: #{_ann_forward_impl.1} parent=0 // pred_fallthru
    _
  // Predicated region
  $region34: #{_ann_forward_impl.1} parent=0 // pred_check
    _
  $region35: #{_ann_forward_impl.1} parent=0 // pred_check_branch
    %33 = sbr.rel (0) target = $region37
  $region36: #{_ann_forward_impl.1} parent=0 // pred_region
    _
  $region37: #{_ann_forward_impl.1} parent=0 // pred_fallthru
    _
  %v35 = vld [vmem:[%s0] sm:$0xff]
  %v36 = vld [vmem:[%s0 + $0x8] sm:$0xff]
  %v37 = vld [vmem:[%s0 + $0x10] sm:$0xff]
  %v38 = vld [vmem:[%s0 + $0x18] sm:$0xff]
  %v39 = vld [vmem:[%s0 + $0x20] sm:$0xff]
  %v40 = vld [vmem:[%s0 + $0x28] sm:$0xff]
  %v41 = vld [vmem:[%s0 + $0x30] sm:$0xff]
  %v42 = vld [vmem:[%s0 + $0x38] sm:$0xff]
  %v43 = vld [vmem:[%s0 + $0x40] sm:$0xff]
  %v44 = vld [vmem:[%s0 + $0x48] sm:$0xff]
  %v45 = vld [vmem:[%s0 + $0x50] sm:$0xff]
  %v46 = vld [vmem:[%s0 + $0x58] sm:$0xff]
  %v47 = vld [vmem:[%s0 + $0x60] sm:$0xff]
  %v48 = vld [vmem:[%s0 + $0x68] sm:$0xff]
  %v49 = vld [vmem:[%s0 + $0x70] sm:$0xff]
  %v50 = vld [vmem:[%s0 + $0x78] sm:$0xff]
  %v51 = vpack.c.bf16 %v36, %v35
  %v52 = vpack.c.bf16 %v38, %v37
  %v53 = vpack.c.bf16 %v40, %v39
  %v54 = vpack.c.bf16 %v42, %v41
  %v55 = vpack.c.bf16 %v44, %v43
  %v56 = vpack.c.bf16 %v46, %v45
  %v57 = vpack.c.bf16 %v48, %v47
  %v58 = vpack.c.bf16 %v50, %v49
  %v59 = vld [vmem:[%s1] sm:$0xf]
  %v60 = vld [vmem:[%s1 + $0x4] sm:$0xf]
  %v61 = vld [vmem:[%s1 + $0x8] sm:$0xf]
  %v62 = vld [vmem:[%s1 + $0xc] sm:$0xf]
  %v63 = vld [vmem:[%s1 + $0x10] sm:$0xf]
  %v64 = vld [vmem:[%s1 + $0x14] sm:$0xf]
  %v65 = vld [vmem:[%s2] sm:$0xff]
  %v66 = vld [vmem:[%s2 + $0x8] sm:$0xff]
  %v67 = vld [vmem:[%s2 + $0x10] sm:$0xff]
  %v68 = vld [vmem:[%s2 + $0x18] sm:$0xff]
  %v69 = vld [vmem:[%s2 + $0x20] sm:$0xff]
  %v70 = vld [vmem:[%s2 + $0x28] sm:$0xff]
  %72 = vset.pattern.permute.xlu0 0
  %73 = vperm.xlu0 %72, %v65
  %v74 = vpop.permute.xlu0 %73
  %77 = vset.pattern.permute.xlu0 0
  %78 = vperm.xlu0 %77, %v66
  %v79 = vpop.permute.xlu0 %78
  %82 = vset.pattern.permute.xlu0 0
  %83 = vperm.xlu0 %82, %v67
  %v84 = vpop.permute.xlu0 %83
  %87 = vset.pattern.permute.xlu0 0
  %88 = vperm.xlu0 %87, %v68
  %v89 = vpop.permute.xlu0 %88
  %92 = vset.pattern.permute.xlu0 0
  %93 = vperm.xlu0 %92, %v69
  %v94 = vpop.permute.xlu0 %93
  %97 = vset.pattern.permute.xlu0 0
  %98 = vperm.xlu0 %97, %v70
  %v99 = vpop.permute.xlu0 %98
  %v107 = vunpack.c.l.b16 %v59
  %v108 = vunpack.c.l.b16 %v60
  %v109 = vunpack.c.l.b16 %v61
  %v110 = vunpack.c.l.b16 %v62
  %v111 = vunpack.c.l.b16 %v63
  %v112 = vunpack.c.l.b16 %v64
  %v113 = vpack.c.b16 %v108, %v107
  %v114 = vpack.c.b16 %v110, %v109
  %v115 = vpack.c.b16 %v112, %v111
  %vm116 = vcmask 244736
  %v118 = vsel %vm116, %v113, 0
  %v121 = vsel %vm116, %v114, 0
  %v124 = vsel %vm116, %v115, 0
  %v127 = vsel %vm116, %v51, 0
  %v130 = vsel %vm116, %v52, 0
  %v133 = vsel %vm116, %v53, 0
  %v136 = vsel %vm116, %v54, 0
  %v139 = vsel %vm116, %v55, 0
  %v142 = vsel %vm116, %v56, 0
  %v145 = vsel %vm116, %v57, 0
  %v148 = vsel %vm116, %v58, 0
  %150 = vmatprep.subr.bf16.mxu0 0
  %151 = vmatpush1.bf16.xpose.msra.mxu0 %v127
  %152 = vmatprep.subr.bf16.mxu0 0
  %153 = vmatpush1.bf16.xpose.msra.mxu0 %v130
  %154 = vmatprep.subr.bf16.mxu0 0
  %155 = vmatpush1.bf16.xpose.msra.mxu0 %v133
  %156 = vmatprep.subr.bf16.mxu0 0
  %157 = vmatpush1.bf16.xpose.msra.mxu0 %v136
  %158 = vmatprep.subr.bf16.mxu0 0
  %159 = vmatpush1.bf16.xpose.msra.mxu0 %v139
  %160 = vmatprep.subr.bf16.mxu0 0
  %161 = vmatpush1.bf16.xpose.msra.mxu0 %v142
  %162 = vmatprep.subr.bf16.mxu0 0
  %163 = vmatpush1.bf16.xpose.msra.mxu0 %v145
  %164 = vmatprep.subr.bf16.mxu0 0
  %165 = vmatpush1.bf16.xpose.msra.mxu0 %v148
  %166 = vmatprep.subr.bf16.mxu0 0
  %167 = vmatpush1.bf16.xpose.msra.mxu0 0
  %168 = vmatprep.subr.bf16.mxu0 0
  %169 = vmatpush1.bf16.xpose.msra.mxu0 0
  %170 = vmatprep.subr.bf16.mxu0 0
  %171 = vmatpush1.bf16.xpose.msra.mxu0 0
  %172 = vmatprep.subr.bf16.mxu0 0
  %173 = vmatpush1.bf16.xpose.msra.mxu0 0
  %174 = vmatprep.subr.bf16.mxu0 0
  %175 = vmatpush1.bf16.xpose.msra.mxu0 0
  %176 = vmatprep.subr.bf16.mxu0 0
  %177 = vmatpush1.bf16.xpose.msra.mxu0 0
  %178 = vmatprep.subr.bf16.mxu0 0
  %179 = vmatpush1.bf16.xpose.msra.mxu0 0
  %180 = vmatprep.subr.bf16.mxu0 0
  %181 = vmatpush1.bf16.xpose.msra.mxu0 0
  %182 = vmatprep.mubr.bf16.mxu0 0
  %183 = vmatmul.mubr.bf16.gmra.mrb[0].mxu0 %v118
  %v184 = vpop.f32.mrb[0].mxu0
  %v185 = vadd.f32 %v74, %v184
  %v186 = vpop.f32.mrb[0].mxu0
  %v187 = vpop.f32.mrb[0].mxu0
  %v188 = vadd.f32 %v79, %v187
  %v189 = vpop.f32.mrb[0].mxu0
  %190 = vmatprep.mubr.bf16.mxu0 0
  %191 = vmatmul.mubr.bf16.gmra.mrb[0].mxu0 %v121
  %v192 = vpop.f32.mrb[0].mxu0
  %v193 = vadd.f32 %v84, %v192
  %v194 = vpop.f32.mrb[0].mxu0
  %v195 = vpop.f32.mrb[0].mxu0
  %v196 = vadd.f32 %v89, %v195
  %v197 = vpop.f32.mrb[0].mxu0
  %198 = vmatprep.mubr.bf16.mxu0 0
  %199 = vmatmul.mubr.bf16.gmra.mrb[0].mxu0 %v124
  %v200 = vpop.f32.mrb[0].mxu0
  %v201 = vadd.f32 %v94, %v200
  %v202 = vpop.f32.mrb[0].mxu0
  %v203 = vpop.f32.mrb[0].mxu0
  %v204 = vadd.f32 %v99, %v203
  %v205 = vpop.f32.mrb[0].mxu0
  %206 = vdwg.mxu0
  %v207 = vmax.f32 %v185, 0.0
  %v208 = vmax.f32 %v188, 0.0
  %v209 = vmax.f32 %v193, 0.0
  %v210 = vmax.f32 %v196, 0.0
  %v211 = vmax.f32 %v201, 0.0
  %v212 = vmax.f32 %v204, 0.0
  %v213 = vpack.c.bf16 %v208, %v207
  %v214 = vpack.c.bf16 %v210, %v209
  %v215 = vpack.c.bf16 %v212, %v211
  %v216 = vld [vmem:[%s3] sm:$0xf]
  %v217 = vld [vmem:[%s3 + $0x4] sm:$0xf]
  %v218 = vld [vmem:[%s3 + $0x8] sm:$0xf]
  %v219 = vld [vmem:[%s3 + $0xc] sm:$0xf]
  %v220 = vld [vmem:[%s3 + $0x10] sm:$0xf]
  %v221 = vld [vmem:[%s3 + $0x14] sm:$0xf]
  %v222 = vld [vmem:[%s3 + $0x18] sm:$0xf]
  %v223 = vld [vmem:[%s3 + $0x1c] sm:$0xf]
  %v224 = vld [vmem:[%s4] sm:$0xff]
  %v225 = vld [vmem:[%s4 + $0x8] sm:$0xff]
  %v226 = vld [vmem:[%s4 + $0x10] sm:$0xff]
  %v227 = vld [vmem:[%s4 + $0x18] sm:$0xff]
  %v228 = vld [vmem:[%s4 + $0x20] sm:$0xff]
  %v229 = vld [vmem:[%s4 + $0x28] sm:$0xff]
  %v230 = vld [vmem:[%s4 + $0x30] sm:$0xff]
  %v231 = vld [vmem:[%s4 + $0x38] sm:$0xff]
  %233 = vset.pattern.permute.xlu0 0
  %234 = vperm.xlu0 %233, %v224
  %v235 = vpop.permute.xlu0 %234
  %238 = vset.pattern.permute.xlu0 0
  %239 = vperm.xlu0 %238, %v225
  %v240 = vpop.permute.xlu0 %239
  %243 = vset.pattern.permute.xlu0 0
  %244 = vperm.xlu0 %243, %v226
  %v245 = vpop.permute.xlu0 %244
  %248 = vset.pattern.permute.xlu0 0
  %249 = vperm.xlu0 %248, %v227
  %v250 = vpop.permute.xlu0 %249
  %253 = vset.pattern.permute.xlu0 0
  %254 = vperm.xlu0 %253, %v228
  %v255 = vpop.permute.xlu0 %254
  %258 = vset.pattern.permute.xlu0 0
  %259 = vperm.xlu0 %258, %v229
  %v260 = vpop.permute.xlu0 %259
  %263 = vset.pattern.permute.xlu0 0
  %264 = vperm.xlu0 %263, %v230
  %v265 = vpop.permute.xlu0 %264
  %268 = vset.pattern.permute.xlu0 0
  %269 = vperm.xlu0 %268, %v231
  %v270 = vpop.permute.xlu0 %269
  %v280 = vunpack.c.l.b16 %v216
  %v281 = vunpack.c.l.b16 %v217
  %v282 = vunpack.c.l.b16 %v218
  %v283 = vunpack.c.l.b16 %v219
  %v284 = vunpack.c.l.b16 %v220
  %v285 = vunpack.c.l.b16 %v221
  %v286 = vunpack.c.l.b16 %v222
  %v287 = vunpack.c.l.b16 %v223
  %v288 = vpack.c.b16 %v281, %v280
  %v289 = vpack.c.b16 %v283, %v282
  %v290 = vpack.c.b16 %v285, %v284
  %v291 = vpack.c.b16 %v287, %v286
  %vm292 = vcmask 392192
  %v294 = vsel %vm292, %v288, 0
  %v297 = vsel %vm292, %v289, 0
  %v300 = vsel %vm292, %v290, 0
  %v303 = vsel %vm292, %v291, 0
  %305 = vmatprep.subr.bf16.mxu0 0
  %306 = vmatpush1.bf16.msra.mxu0 %v213
  %307 = vmatprep.subr.bf16.mxu0 0
  %308 = vmatpush1.bf16.msra.mxu0 %v214
  %309 = vmatprep.subr.bf16.mxu0 0
  %310 = vmatpush1.bf16.msra.mxu0 %v215
  %311 = vmatprep.subr.bf16.mxu0 0
  %312 = vmatpush1.bf16.msra.mxu0 0
  %313 = vmatprep.subr.bf16.mxu0 0
  %314 = vmatpush1.bf16.msra.mxu0 0
  %315 = vmatprep.subr.bf16.mxu0 0
  %316 = vmatpush1.bf16.msra.mxu0 0
  %317 = vmatprep.subr.bf16.mxu0 0
  %318 = vmatpush1.bf16.msra.mxu0 0
  %319 = vmatprep.subr.bf16.mxu0 0
  %320 = vmatpush1.bf16.msra.mxu0 0
  %321 = vmatprep.subr.bf16.mxu0 0
  %322 = vmatpush1.bf16.msra.mxu0 0
  %323 = vmatprep.subr.bf16.mxu0 0
  %324 = vmatpush1.bf16.msra.mxu0 0
  %325 = vmatprep.subr.bf16.mxu0 0
  %326 = vmatpush1.bf16.msra.mxu0 0
  %327 = vmatprep.subr.bf16.mxu0 0
  %328 = vmatpush1.bf16.msra.mxu0 0
  %329 = vmatprep.subr.bf16.mxu0 0
  %330 = vmatpush1.bf16.msra.mxu0 0
  %331 = vmatprep.subr.bf16.mxu0 0
  %332 = vmatpush1.bf16.msra.mxu0 0
  %333 = vmatprep.subr.bf16.mxu0 0
  %334 = vmatpush1.bf16.msra.mxu0 0
  %335 = vmatprep.subr.bf16.mxu0 0
  %336 = vmatpush1.bf16.msra.mxu0 0
  %337 = vmatprep.mubr.bf16.mxu0 0
  %338 = vmatmul.mubr.bf16.gmra.mrb[0].mxu0 %v294
  %v339 = vpop.f32.mrb[0].mxu0
  %v340 = vadd.f32 %v235, %v339
  %v341 = vpop.f32.mrb[0].mxu0
  %v342 = vpop.f32.mrb[0].mxu0
  %v343 = vadd.f32 %v240, %v342
  %v344 = vpop.f32.mrb[0].mxu0
  %345 = vmatprep.mubr.bf16.mxu0 0
  %346 = vmatmul.mubr.bf16.gmra.mrb[0].mxu0 %v297
  %v347 = vpop.f32.mrb[0].mxu0
  %v348 = vadd.f32 %v245, %v347
  %v349 = vpop.f32.mrb[0].mxu0
  %v350 = vpop.f32.mrb[0].mxu0
  %v351 = vadd.f32 %v250, %v350
  %v352 = vpop.f32.mrb[0].mxu0
  %353 = vmatprep.mubr.bf16.mxu0 0
  %354 = vmatmul.mubr.bf16.gmra.mrb[0].mxu0 %v300
  %v355 = vpop.f32.mrb[0].mxu0
  %v356 = vadd.f32 %v255, %v355
  %v357 = vpop.f32.mrb[0].mxu0
  %v358 = vpop.f32.mrb[0].mxu0
  %v359 = vadd.f32 %v260, %v358
  %v360 = vpop.f32.mrb[0].mxu0
  %361 = vmatprep.mubr.bf16.mxu0 0
  %362 = vmatmul.mubr.bf16.gmra.mrb[0].mxu0 %v303
  %v363 = vpop.f32.mrb[0].mxu0
  %v364 = vadd.f32 %v265, %v363
  %v365 = vpop.f32.mrb[0].mxu0
  %v366 = vpop.f32.mrb[0].mxu0
  %v367 = vadd.f32 %v270, %v366
  %v368 = vpop.f32.mrb[0].mxu0
  %369 = vdwg.mxu0
  %v370 = vmax.f32 %v340, 0.0
  %v371 = vmax.f32 %v343, 0.0
  %v372 = vmax.f32 %v348, 0.0
  %v373 = vmax.f32 %v351, 0.0
  %v374 = vmax.f32 %v356, 0.0
  %v375 = vmax.f32 %v359, 0.0
  %v376 = vmax.f32 %v364, 0.0
  %v377 = vmax.f32 %v367, 0.0
  %v378 = vpack.c.bf16 %v371, %v370
  %v379 = vpack.c.bf16 %v373, %v372
  %v380 = vpack.c.bf16 %v375, %v374
  %v381 = vpack.c.bf16 %v377, %v376
  %v382 = vld [vmem:[%s5] sm:$0xf]
  %v383 = vld [vmem:[%s5 + $0x4] sm:$0xf]
  %v384 = vld [vmem:[%s5 + $0x8] sm:$0xf]
  %v385 = vld [vmem:[%s5 + $0xc] sm:$0xf]
  %v386 = vld [vmem:[%s5 + $0x10] sm:$0xf]
  %v387 = vld [vmem:[%s5 + $0x14] sm:$0xf]
  %v388 = vld [vmem:[%s5 + $0x18] sm:$0xf]
  %v389 = vld [vmem:[%s5 + $0x1c] sm:$0xf]
  %v390 = vld [vmem:[%s6] sm:$0xff]
  %v391 = vld [vmem:[%s6 + $0x8] sm:$0xff]
  %v392 = vld [vmem:[%s6 + $0x10] sm:$0xff]
  %v393 = vld [vmem:[%s6 + $0x18] sm:$0xff]
  %v394 = vld [vmem:[%s6 + $0x20] sm:$0xff]
  %v395 = vld [vmem:[%s6 + $0x28] sm:$0xff]
  %v396 = vld [vmem:[%s6 + $0x30] sm:$0xff]
  %v397 = vld [vmem:[%s6 + $0x38] sm:$0xff]
  %399 = vset.pattern.permute.xlu0 0
  %400 = vperm.xlu0 %399, %v390
  %v401 = vpop.permute.xlu0 %400
  %404 = vset.pattern.permute.xlu0 0
  %405 = vperm.xlu0 %404, %v391
  %v406 = vpop.permute.xlu0 %405
  %409 = vset.pattern.permute.xlu0 0
  %410 = vperm.xlu0 %409, %v392
  %v411 = vpop.permute.xlu0 %410
  %414 = vset.pattern.permute.xlu0 0
  %415 = vperm.xlu0 %414, %v393
  %v416 = vpop.permute.xlu0 %415
  %419 = vset.pattern.permute.xlu0 0
  %420 = vperm.xlu0 %419, %v394
  %v421 = vpop.permute.xlu0 %420
  %424 = vset.pattern.permute.xlu0 0
  %425 = vperm.xlu0 %424, %v395
  %v426 = vpop.permute.xlu0 %425
  %429 = vset.pattern.permute.xlu0 0
  %430 = vperm.xlu0 %429, %v396
  %v431 = vpop.permute.xlu0 %430
  %434 = vset.pattern.permute.xlu0 0
  %435 = vperm.xlu0 %434, %v397
  %v436 = vpop.permute.xlu0 %435
  %v446 = vunpack.c.l.b16 %v382
  %v447 = vunpack.c.l.b16 %v383
  %v448 = vunpack.c.l.b16 %v384
  %v449 = vunpack.c.l.b16 %v385
  %v450 = vunpack.c.l.b16 %v386
  %v451 = vunpack.c.l.b16 %v387
  %v452 = vunpack.c.l.b16 %v388
  %v453 = vunpack.c.l.b16 %v389
  %v454 = vpack.c.b16 %v447, %v446
  %v455 = vpack.c.b16 %v449, %v448
  %v456 = vpack.c.b16 %v451, %v450
  %v457 = vpack.c.b16 %v453, %v452
  %vm458 = vcmask 523264
  %v460 = vsel %vm458, %v454, 0
  %v463 = vsel %vm458, %v455, 0
  %v466 = vsel %vm458, %v456, 0
  %v469 = vsel %vm458, %v457, 0
  %471 = vmatprep.subr.bf16.mxu0 0
  %472 = vmatpush1.bf16.msra.mxu0 %v378
  %473 = vmatprep.subr.bf16.mxu0 0
  %474 = vmatpush1.bf16.msra.mxu0 %v379
  %475 = vmatprep.subr.bf16.mxu0 0
  %476 = vmatpush1.bf16.msra.mxu0 %v380
  %477 = vmatprep.subr.bf16.mxu0 0
  %478 = vmatpush1.bf16.msra.mxu0 %v381
  %479 = vmatprep.subr.bf16.mxu0 0
  %480 = vmatpush1.bf16.msra.mxu0 0
  %481 = vmatprep.subr.bf16.mxu0 0
  %482 = vmatpush1.bf16.msra.mxu0 0
  %483 = vmatprep.subr.bf16.mxu0 0
  %484 = vmatpush1.bf16.msra.mxu0 0
  %485 = vmatprep.subr.bf16.mxu0 0
  %486 = vmatpush1.bf16.msra.mxu0 0
  %487 = vmatprep.subr.bf16.mxu0 0
  %488 = vmatpush1.bf16.msra.mxu0 0
  %489 = vmatprep.subr.bf16.mxu0 0
  %490 = vmatpush1.bf16.msra.mxu0 0
  %491 = vmatprep.subr.bf16.mxu0 0
  %492 = vmatpush1.bf16.msra.mxu0 0
  %493 = vmatprep.subr.bf16.mxu0 0
  %494 = vmatpush1.bf16.msra.mxu0 0
  %495 = vmatprep.subr.bf16.mxu0 0
  %496 = vmatpush1.bf16.msra.mxu0 0
  %497 = vmatprep.subr.bf16.mxu0 0
  %498 = vmatpush1.bf16.msra.mxu0 0
  %499 = vmatprep.subr.bf16.mxu0 0
  %500 = vmatpush1.bf16.msra.mxu0 0
  %501 = vmatprep.subr.bf16.mxu0 0
  %502 = vmatpush1.bf16.msra.mxu0 0
  %503 = vmatprep.mubr.bf16.mxu0 0
  %504 = vmatmul.mubr.bf16.gmra.mrb[0].mxu0 %v460
  %v505 = vpop.f32.mrb[0].mxu0
  %v506 = vadd.f32 %v401, %v505
  %v507 = vpop.f32.mrb[0].mxu0
  %v508 = vpop.f32.mrb[0].mxu0
  %v509 = vadd.f32 %v406, %v508
  %v510 = vpop.f32.mrb[0].mxu0
  %511 = vmatprep.mubr.bf16.mxu0 0
  %512 = vmatmul.mubr.bf16.gmra.mrb[0].mxu0 %v463
  %v513 = vpop.f32.mrb[0].mxu0
  %v514 = vadd.f32 %v411, %v513
  %v515 = vpop.f32.mrb[0].mxu0
  %v516 = vpop.f32.mrb[0].mxu0
  %v517 = vadd.f32 %v416, %v516
  %v518 = vpop.f32.mrb[0].mxu0
  %519 = vmatprep.mubr.bf16.mxu0 0
  %520 = vmatmul.mubr.bf16.gmra.mrb[0].mxu0 %v466
  %v521 = vpop.f32.mrb[0].mxu0
  %v522 = vadd.f32 %v421, %v521
  %v523 = vpop.f32.mrb[0].mxu0
  %v524 = vpop.f32.mrb[0].mxu0
  %v525 = vadd.f32 %v426, %v524
  %v526 = vpop.f32.mrb[0].mxu0
  %527 = vmatprep.mubr.bf16.mxu0 0
  %528 = vmatmul.mubr.bf16.gmra.mrb[0].mxu0 %v469
  %v529 = vpop.f32.mrb[0].mxu0
  %v530 = vadd.f32 %v431, %v529
  %v531 = vpop.f32.mrb[0].mxu0
  %v532 = vpop.f32.mrb[0].mxu0
  %v533 = vadd.f32 %v436, %v532
  %v534 = vpop.f32.mrb[0].mxu0
  %535 = vdwg.mxu0
  %v536 = vmax.f32 %v506, 0.0
  %v537 = vmax.f32 %v509, 0.0
  %v538 = vmax.f32 %v514, 0.0
  %v539 = vmax.f32 %v517, 0.0
  %v540 = vmax.f32 %v522, 0.0
  %v541 = vmax.f32 %v525, 0.0
  %v542 = vmax.f32 %v530, 0.0
  %v543 = vmax.f32 %v533, 0.0
  %v544 = vld [vmem:[%s7] sm:$0xff]
  %v545 = vld [vmem:[%s7 + $0x8] sm:$0xff]
  %v546 = vld [vmem:[%s7 + $0x10] sm:$0xff]
  %v547 = vld [vmem:[%s7 + $0x18] sm:$0xff]
  %v548 = vld [vmem:[%s7 + $0x20] sm:$0xff]
  %v549 = vld [vmem:[%s7 + $0x28] sm:$0xff]
  %v550 = vld [vmem:[%s7 + $0x30] sm:$0xff]
  %v551 = vld [vmem:[%s7 + $0x38] sm:$0xff]
  %553 = vset.pattern.permute.xlu0 0
  %554 = vperm.xlu0 %553, %v544
  %v555 = vpop.permute.xlu0 %554
  %558 = vset.pattern.permute.xlu0 0
  %559 = vperm.xlu0 %558, %v545
  %v560 = vpop.permute.xlu0 %559
  %563 = vset.pattern.permute.xlu0 0
  %564 = vperm.xlu0 %563, %v546
  %v565 = vpop.permute.xlu0 %564
  %568 = vset.pattern.permute.xlu0 0
  %569 = vperm.xlu0 %568, %v547
  %v570 = vpop.permute.xlu0 %569
  %573 = vset.pattern.permute.xlu0 0
  %574 = vperm.xlu0 %573, %v548
  %v575 = vpop.permute.xlu0 %574
  %578 = vset.pattern.permute.xlu0 0
  %579 = vperm.xlu0 %578, %v549
  %v580 = vpop.permute.xlu0 %579
  %583 = vset.pattern.permute.xlu0 0
  %584 = vperm.xlu0 %583, %v550
  %v585 = vpop.permute.xlu0 %584
  %588 = vset.pattern.permute.xlu0 0
  %589 = vperm.xlu0 %588, %v551
  %v590 = vpop.permute.xlu0 %589
  %v592 = vmul.f32 %v555, %v536
  %v593 = vmul.f32 %v560, %v537
  %v594 = vmul.f32 %v565, %v538
  %v595 = vmul.f32 %v570, %v539
  %v596 = vmul.f32 %v575, %v540
  %v597 = vmul.f32 %v580, %v541
  %v598 = vmul.f32 %v585, %v542
  %v599 = vmul.f32 %v590, %v543
  %v600 = vadd.f32 %v592, %v593
  %v601 = vadd.f32 %v600, %v594
  %v602 = vadd.f32 %v601, %v595
  %v603 = vadd.f32 %v602, %v596
  %v604 = vadd.f32 %v603, %v597
  %v605 = vadd.f32 %v604, %v598
  %v606 = vadd.f32 %v605, %v599
  %v607 = vrot.slane %v606, 4
  %v608 = vadd.f32 %v606, %v607
  %v609 = vrot.slane %v608, 2
  %v610 = vadd.f32 %v608, %v609
  %v611 = vrot.slane %v610, 1
  %v612 = vadd.f32 %v610, %v611
  %v613 = vld [vmem:[#allocation2] sm:$0x1]
  %615 = vset.pattern.permute.xlu0 0
  %616 = vperm.xlu0 %615, %v613
  %v617 = vpop.permute.xlu0 %616
  %v619 = vlaneseq
  %v620 = vshrl.u32 %v619, 7
  %v621 = vsub.s32 0, %v620
  %v622 = vrot.slane %v617, %v621
  %v623 = vadd.f32 %v612, %v622
  %624 = vst [vmem:[%s9] sm:$0x1] %v623
  // Predicated region
  $region38: #{_ann_forward_impl.1} parent=0 // pred_check
    _
  $region39: #{_ann_forward_impl.1} parent=0 // pred_check_branch
    %626 = sbr.rel (0) target = $region41
  $region40: #{_ann_forward_impl.1} parent=0 // pred_region
    _
  $region41: #{_ann_forward_impl.1} parent=0 // pred_fallthru
    _
  // Predicated region
  $region42: #{_ann_forward_impl.1} parent=0 // pred_check
    _
  $region43: #{_ann_forward_impl.1} parent=0 // pred_check_branch
    %628 = sbr.rel (0) target = $region45
  $region44: #{_ann_forward_impl.1} parent=0 // pred_region
    _
  $region45: #{_ann_forward_impl.1} parent=0 // pred_fallthru
    _

</llo_original>
